<compile_context>
chip_gen: v6e
topology: v6e:2x2x1
jax: 0.10.0
libtpu: 0.0.40
codegen_flags: <defaults>
</compile_context>

<pallas_src>
import functools
import math

import jax
import jax.numpy as jnp
from jax.experimental import pallas as pl
from jax.experimental.pallas import tpu as pltpu

_HASH_ODD = 0x27D4EB2F            # odd 31-bit constant, mixes per-step PRNG seeds
_TARGET_BLOCK_BYTES = 4 * 1024 * 1024
_VMEM_LIMIT_BYTES = 32 * 1024 * 1024


def _pe_dropout_kernel(seed_ref, x_ref, pe_ref, o_ref, *, p, training):
    # x_ref / o_ref: (b_tile, t_rows, cols); pe_ref: (t_rows, cols).
    y = x_ref[...] + pe_ref[...][None, :, :]

    if training and p >= 1.0:
        # Degenerate dropout: everything dropped.
        y = jnp.zeros_like(y)
    elif training and p > 0.0:
        # Unique, hash-mixed seed per grid step so tiles draw independent streams.
        step = pl.program_id(0) * pl.num_programs(1) + pl.program_id(1)
        pltpu.prng_seed(seed_ref[0], step * jnp.int32(_HASH_ODD))
        bits = pltpu.prng_random_bits(y.shape)
        if bits.dtype != jnp.uint32:
            bits = pltpu.bitcast(bits, jnp.uint32)
        # Saturating threshold; keep with prob (1 - p).
        threshold = jnp.uint32(min(int(p * (2 ** 32)), 2 ** 32 - 1))
        inv_keep = jnp.asarray(1.0 / (1.0 - p), dtype=y.dtype)
        y = jnp.where(bits >= threshold, y * inv_keep, jnp.zeros_like(y))

    o_ref[...] = y.astype(o_ref.dtype)


def make_positional_encoding(max_len, d_model, dtype=jnp.float32):
    """Same formula as the PyTorch buffer; shape (max_len, d_model).

    The singleton middle dim of the torch buffer (max_len, 1, d_model) is
    squeezed out since forward's permute just turns it into the broadcast
    batch dim.
    """
    position = jnp.arange(max_len, dtype=jnp.float32)[:, None]
    div_term = jnp.exp(
        jnp.arange(0, d_model, 2, dtype=jnp.float32)
        * (-math.log(10000.0) / d_model)
    )
    pe = jnp.zeros((max_len, d_model), dtype=jnp.float32)
    pe = pe.at[:, 0::2].set(jnp.sin(position * div_term))
    pe = pe.at[:, 1::2].set(jnp.cos(position * div_term))
    return pe.astype(dtype)


def _sublane_quantum(dtype):
    """Sublane alignment by element width: 8 (f32), 16 (bf16), 32 (int8/fp8)."""
    return {4: 8, 2: 16, 1: 32}.get(jnp.dtype(dtype).itemsize, 8)


def _divisor_tile(n, quantum, cap):
    """Largest tile <= cap that is a multiple of `quantum` and (preferably) divides n."""
    if n <= cap:
        return n
    cap_q = max(quantum, (cap // quantum) * quantum)
    for t in range(cap_q, 0, -quantum):
        if n % t == 0:
            return t
    return cap_q                      # ragged last tile (pl.cdiv grid handles it)


def positional_encoding_forward(x, pe, *, p=0.1, training=False, seed=0):
    """x: (B, S, D); pe: (max_len, D). Returns (B, S, D) = dropout(x + pe[:S])."""
    B, S, D = x.shape
    max_len, pe_d = pe.shape
    assert pe_d == D and S <= max_len

    if pe.dtype != x.dtype:
        # Slice first so the cast only touches the rows actually used.
        pe = pe[:S].astype(x.dtype)
        max_len = S

    itemsize = jnp.dtype(x.dtype).itemsize
    quantum = _sublane_quantum(x.dtype)

    lane_dense = (S * D) % 128 == 0
    pad = 0
    if lane_dense:
        # Free reshape of contiguous data -> full-width (unmasked) stores.
        rows, cols = (S * D) // 128, 128
        xk = x.reshape(B, rows, cols)
    else:
        # Pad D to a multiple of 128 (lane-dense output beats masked vst.msk).
        pad = (-D) % 128
        rows, cols = S, D + pad
        xk = jnp.pad(x, ((0, 0), (0, 0), (0, pad)))

    # ---- block sizing: byte-targeted, divisor-preferring, batch-tiled ----
    plane_bytes = rows * cols * itemsize
    if plane_bytes >= _TARGET_BLOCK_BYTES:
        cap_rows = max(quantum, _TARGET_BLOCK_BYTES // (cols * itemsize))
        t_rows = _divisor_tile(rows, quantum, cap_rows)
        b_tile = 1
    else:
        t_rows = rows
        b_tile = _divisor_tile(B, 1, max(1, _TARGET_BLOCK_BYTES // plane_bytes))

    n_row_tiles = pl.cdiv(rows, t_rows)
    n_b_tiles = pl.cdiv(B, b_tile)

    # ---- pe operand: window the full buffer when legal, else slice ----
    full_pe_rows = (max_len * D) // 128 if (lane_dense and (max_len * D) % 128 == 0) else None
    if full_pe_rows is not None and full_pe_rows >= rows and (
            t_rows % 8 == 0 or t_rows == full_pe_rows):
        pek = pe.reshape(full_pe_rows, 128)           # no slice op in the wrapper
    elif lane_dense:
        pek = pe[:S].reshape(rows, cols)
    else:
        pek = jnp.pad(pe[:S], ((0, 0), (0, pad)))

    # ---- grid: pe reuse on the inner axis; longest real axis outermost ----
    if n_row_tiles == 1 and n_b_tiles > 1:
        grid = (n_b_tiles, n_row_tiles)
        x_map = lambda b, r, seed_ref: (b, r, 0)
        pe_map = lambda b, r, seed_ref: (r, 0)
    else:
        grid = (n_row_tiles, n_b_tiles)
        x_map = lambda r, b, seed_ref: (b, r, 0)
        pe_map = lambda r, b, seed_ref: (r, 0)

    kernel = functools.partial(_pe_dropout_kernel, p=float(p), training=bool(training))
    seed_arr = jnp.asarray([seed], dtype=jnp.int32)

    out = pl.pallas_call(
        kernel,
        out_shape=jax.ShapeDtypeStruct((B, rows, cols), x.dtype),
        grid_spec=pltpu.PrefetchScalarGridSpec(
            num_scalar_prefetch=1,                    # dropout seed in SMEM
            grid=grid,
            in_specs=[
                pl.BlockSpec((b_tile, t_rows, cols), x_map),
                pl.BlockSpec((t_rows, cols), pe_map),
            ],
            out_specs=pl.BlockSpec((b_tile, t_rows, cols), x_map),
        ),
        compiler_params=pltpu.CompilerParams(
            dimension_semantics=("parallel", "parallel"),   # v7x: shard across 2 TCs
            vmem_limit_bytes=_VMEM_LIMIT_BYTES,
        ),
    )(seed_arr, xk, pek)

    if lane_dense:
        return out.reshape(B, S, D)
    return out[:, :, :D] if pad else out


if __name__ == "__main__":
    # Small shapes consistent with the module: batch=2, seq=8, d_model=32.
    B, S, D = 2, 8, 32
    max_len = 64

    key = jax.random.PRNGKey(0)
    x = jax.random.normal(key, (B, S, D), dtype=jnp.float32)
    pe = make_positional_encoding(max_len, D)

    # Eval mode (dropout = identity): exact check against plain JAX.
    out_eval = jax.block_until_ready(positional_encoding_forward(x, pe, training=False))
    ref = x + pe[:S][None, :, :]
    assert out_eval.shape == (B, S, D)
    assert jnp.allclose(out_eval, ref, atol=1e-6, rtol=1e-6)

    # Training mode exercises the TPU hardware PRNG (no CPU/interpret lowering).
    if jax.default_backend() == "tpu":
        out_train = jax.block_until_ready(
            positional_encoding_forward(x, pe, training=True, seed=1234))
        assert out_train.shape == (B, S, D)
        # Every element is either dropped (exactly 0) or (x + pe) / (1 - p).
        scaled = ref / (1.0 - 0.1)
        ok = jnp.isclose(out_train, scaled, atol=1e-5) | (out_train == 0.0)
        assert bool(jnp.all(ok))

    print("KERNEL_OK")
</pallas_src>

<mosaic_0001>
module attributes {stable_mosaic.version = 11 : i64} {
  func.func @_pe_dropout_kernel(%arg0: i32, %arg1: i32, %arg2: memref<1xi32, #tpu.memory_space<smem>>, %arg3: memref<2x2x128xf32, #tpu.memory_space<vmem>>, %arg4: memref<2x128xf32, #tpu.memory_space<vmem>>, %arg5: memref<2x2x128xf32, #tpu.memory_space<vmem>>) attributes {dimension_semantics = [#tpu.dimension_semantics<parallel>, #tpu.dimension_semantics<parallel>], iteration_bounds = array<i64: 1, 1>, scalar_prefetch = 1 : i64, scratch_operands = 0 : i64, tpu.core_type = #tpu.core_type<tc>, window_params = [{transform_indices = @transform_0, window_bounds = array<i64: 2, 2, 128>}, {transform_indices = @transform_1, window_bounds = array<i64: 2, 128>}, {transform_indices = @transform_2, window_bounds = array<i64: 2, 2, 128>}]} {
    %c0 = arith.constant 0 : index
    %c0_0 = arith.constant 0 : index
    %c0_1 = arith.constant 0 : index
    %0 = vector.load %arg3[%c0, %c0_0, %c0_1] : memref<2x2x128xf32, #tpu.memory_space<vmem>>, vector<2x2x128xf32>
    %c0_2 = arith.constant 0 : index
    %c0_3 = arith.constant 0 : index
    %1 = vector.load %arg4[%c0_2, %c0_3] : memref<2x128xf32, #tpu.memory_space<vmem>>, vector<2x128xf32>
    %2 = vector.shape_cast %1 : vector<2x128xf32> to vector<1x2x128xf32>
    %3 = vector.broadcast %2 : vector<1x2x128xf32> to vector<2x2x128xf32>
    %4 = arith.addf %0, %3 : vector<2x2x128xf32>
    %c0_4 = arith.constant 0 : index
    %c0_5 = arith.constant 0 : index
    %c0_6 = arith.constant 0 : index
    %5 = vector.load %arg5[%c0_4, %c0_5, %c0_6] : memref<2x2x128xf32, #tpu.memory_space<vmem>>, vector<2x2x128xf32>
    tpu.vector_store %arg5[%c0_4, %c0_5, %c0_6], %4 {strides = array<i32>} : memref<2x2x128xf32, #tpu.memory_space<vmem>>, vector<2x2x128xf32>,
    return
  }
  func.func @transform_0(%arg0: i32, %arg1: i32, %arg2: memref<1xi32, #tpu.memory_space<smem>>) -> (i32, i32, i32) {
    %c0_i32 = arith.constant 0 : i32
    %c0_i32_0 = arith.constant 0 : i32
    return %arg1, %arg0, %c0_i32 : i32, i32, i32
  }
  func.func @transform_1(%arg0: i32, %arg1: i32, %arg2: memref<1xi32, #tpu.memory_space<smem>>) -> (i32, i32) {
    %c0_i32 = arith.constant 0 : i32
    %c0_i32_0 = arith.constant 0 : i32
    return %arg0, %c0_i32 : i32, i32
  }
  func.func @transform_2(%arg0: i32, %arg1: i32, %arg2: memref<1xi32, #tpu.memory_space<smem>>) -> (i32, i32, i32) {
    %c0_i32 = arith.constant 0 : i32
    %c0_i32_0 = arith.constant 0 : i32
    return %arg1, %arg0, %c0_i32 : i32, i32, i32
  }
}

</mosaic_0001>

<llo_original>
// kernel: tpu_custom_call.1
$region0: #{tpu_custom_call.1}
  #allocation0 [shape = 'u32[]', space=smem, size = 0x4, offset = 0x4, fixed_abs, tag = 'smem constant byte address 0x4 - core index']
  #allocation1 [shape = 'u32[144,128]{1,0:T(1,128)}', space=vmem, size = 0x12000, scoped, tag = 'internal scratch']
  #allocation2 [shape = 's32[1]{0}', space=sflag, size = 0x4, scoped, tag = 'scoped memory for tpu_custom_call.1']
  #allocation3 [shape = 's32[1]{0:T(128)S(6)}', space=smem, size = 0x200, scoped, tag = 'prefetched SMEM operand 0']
  %s0 = inlined_call_operand.<no memory space> [shape: s32[1], index: 0, kind: input, shape index: {}]
  %s1 = inlined_call_operand.hbm [shape: f32[2,2,128], index: 1, kind: input, shape index: {}]
  %s2 = inlined_call_operand.vmem [shape: f32[2,128], index: 2, kind: input, shape index: {}]
  %s3 = inlined_call_operand.hbm [shape: f32[2,2,128], index: 3, kind: output, shape index: {}]
  %s4 = sld [smem:[#allocation0]]
  $region22: #{tpu_custom_call.1} parent=0
    _
  %s6 = ssub.s32 1, %s4
  %s7 = scalar_select 0, %s6, %s4
  %8 = sst [smem:[#allocation3]] %s0
  $region1: #{tpu_custom_call.1} parent=0
    #allocation4 [shape = 'u8[2048]{0}', space=vmem, size = 0x800, scoped, tag = 'input window, operand 1, single buffered']
    #allocation5 [shape = 's32[1]{0}', space=sflag, size = 0x4, scoped, tag = 'scoped memory for tpu_custom_call.1']
    #allocation6 [shape = 's32[1]{0}', space=sflag, size = 0x4, scoped, tag = 'scoped memory for tpu_custom_call.1']
    #allocation7 [shape = 'u8[2048]{0}', space=vmem, size = 0x800, scoped, tag = 'output window, operand 0, single buffered']
    %9 = vsyncpa [#allocation5], 0
    %10 = vsyncpa [#allocation6], 0
    // Predicated region
    $region2: #{tpu_custom_call.1} parent=1 // pred_check
      _
    $region3: #{tpu_custom_call.1} parent=1 // pred_check_branch
      %12 = sbr.rel (0) target = $region5
    $region4: #{tpu_custom_call.1} parent=1 // pred_region
      %s14 = ssub.s32 64, 64
      %15 = vsyncadd [#allocation5], %s14
      %s16 = sshll.u32 [#allocation4], 4
      %s17 = int_to_ptr.vmem [resolvable:$true] %s16
      %22 = dma.hbm_to_vmem [thread:$0]  %s1, 64, %s17, [#allocation5], 32, 32, 2
    $region5: #{tpu_custom_call.1} parent=1 // pred_fallthru
      _
    // Predicated region
    $region6: #{tpu_custom_call.1} parent=1 // pred_check
      _
    $region7: #{tpu_custom_call.1} parent=1 // pred_check_branch
      %24 = sbr.rel (0) target = $region9
    $region8: #{tpu_custom_call.1} parent=1 // pred_region
      _
    $region9: #{tpu_custom_call.1} parent=1 // pred_fallthru
      _
    // Predicated region
    $region10: #{tpu_custom_call.1} parent=1 // pred_check
      _
    $region11: #{tpu_custom_call.1} parent=1 // pred_check_branch
      %26 = sbr.rel (0) target = $region13
    $region12: #{tpu_custom_call.1} parent=1 // pred_region
      %27 = dma.done [#allocation5], 64
    $region13: #{tpu_custom_call.1} parent=1 // pred_fallthru
      _
    %v28 = vld [vmem:[#allocation4] sm:$0x3]
    %v29 = vld [vmem:[#allocation4 + $0x2] sm:$0x3]
    %v30 = vld [vmem:[%s2] sm:$0x3]
    %v31 = vadd.f32 %v28, %v30
    %v32 = vadd.f32 %v29, %v30
    %33 = vst [vmem:[#allocation7] sm:$0x3] %v31
    %34 = vst [vmem:[#allocation7 + $0x2] sm:$0x3] %v32
    // Predicated region
    $region14: #{tpu_custom_call.1} parent=1 // pred_check
      _
    $region15: #{tpu_custom_call.1} parent=1 // pred_check_branch
      %36 = sbr.rel (0) target = $region17
    $region16: #{tpu_custom_call.1} parent=1 // pred_region
      %s38 = ssub.s32 64, 64
      %39 = vsyncadd [#allocation6], %s38
      %s40 = sshll.u32 [#allocation7], 4
      %s41 = int_to_ptr.vmem [resolvable:$true] %s40
      %46 = dma.vmem_to_hbm [thread:$0]  %s41, 64, %s3, [#allocation6], 32, 32, 2
    $region17: #{tpu_custom_call.1} parent=1 // pred_fallthru
      _
    // Predicated region
    $region18: #{tpu_custom_call.1} parent=1 // pred_check
      _
    $region19: #{tpu_custom_call.1} parent=1 // pred_check_branch
      %48 = sbr.rel (0) target = $region21
    $region20: #{tpu_custom_call.1} parent=1 // pred_region
      %49 = dma.done [#allocation6], 64
    $region21: #{tpu_custom_call.1} parent=1 // pred_fallthru
      _
    %50 = vsyncpa [#allocation5], 1
    %51 = vsyncpa [#allocation6], 1

</llo_original>
